<compile_context>
chip_gen: v6e
topology: v6e:2x2x1
jax: 0.10.0
libtpu: 0.0.40
codegen_flags: <defaults>
</compile_context>

<pallas_src>
import jax
import jax.numpy as jnp
import numpy as np
from jax import lax
from jax.experimental import pallas as pl
from jax.experimental.pallas import tpu as pltpu


def _mirror_kernel(flags_ref, x_ref, o_ref):
    # flags_ref: SMEM (B, 2) int32 — per-batch (flip_h, flip_w) 0/1 decisions
    # x_ref:     VMEM (1, M, W, H) — one batch element, M = C*D
    # o_ref:     VMEM (1, M, W, H) — float16 (or float32 fallback) output
    b = pl.program_id(0)
    _, m_size, w_size, h_size = x_ref.shape

    fh = flags_ref[b, 0].astype(jnp.float32)   # 1.0 -> flip H, 0.0 -> output is zeros
    fw = flags_ref[b, 1].astype(jnp.float32)   # 1.0 -> additionally flip W

    # H-axis operator: anti-identity when flipping, zero matrix otherwise
    # (the zero matrix reproduces the torch module's "output stays zero" branch).
    hi = lax.broadcasted_iota(jnp.int32, (h_size, h_size), 0)
    hj = lax.broadcasted_iota(jnp.int32, (h_size, h_size), 1)
    r_h = jnp.where(hi + hj == h_size - 1, 1.0, 0.0) * fh

    # W-axis operator: anti-identity when flipping, identity otherwise.
    wi = lax.broadcasted_iota(jnp.int32, (w_size, w_size), 0)
    wj = lax.broadcasted_iota(jnp.int32, (w_size, w_size), 1)
    anti_w = jnp.where(wi + wj == w_size - 1, 1.0, 0.0)
    eye_w = jnp.where(wi == wj, 1.0, 0.0)
    r_w = anti_w * fw + eye_w * (1.0 - fw)

    # One (W, H) slice per C*D index: flip H via right-matmul, flip W via
    # left-matmul (cheap dynamic indexing on a leading ref axis; MXU work is
    # trivial next to the HBM traffic).
    def body(m, carry):
        t = x_ref[0, m].astype(jnp.float32)                        # (W, H)
        t = jnp.dot(t, r_h, preferred_element_type=jnp.float32)    # flip H / zero
        t = jnp.dot(r_w, t, preferred_element_type=jnp.float32)    # flip W / copy
        o_ref[0, m] = t.astype(o_ref.dtype)
        return carry

    lax.fori_loop(0, m_size, body, 0)


def _mirror_call(x_m, flags, out_dtype):
    b, m, w, h = x_m.shape
    return pl.pallas_call(
        _mirror_kernel,
        out_shape=jax.ShapeDtypeStruct((b, m, w, h), out_dtype),
        grid_spec=pltpu.PrefetchScalarGridSpec(
            num_scalar_prefetch=1,
            grid=(b,),
            in_specs=[pl.BlockSpec((1, m, w, h), lambda i, f: (i, 0, 0, 0))],
            out_specs=pl.BlockSpec((1, m, w, h), lambda i, f: (i, 0, 0, 0)),
        ),
        compiler_params=pltpu.CompilerParams(
            dimension_semantics=("parallel",),
        ),
    )(flags, x_m)


def mirror_tu(x_bcdwh, flags):
    """Equivalent of Mirror_tu.forward.

    x_bcdwh : (B, C, D, W, H) float array (PyTorch layout)
    flags   : (B, 2) int32, flags[b] = (x_flag > 0.5, y_flag > 0.5)
              (the PyTorch module draws x_flag / y_flag with host-side
               np.random.uniform; here the 0/1 decisions come from the caller)
    returns : (B, C, D, W, H) float16   (matches `.type(torch.HalfTensor)`)
    """
    b, c, d, w, h = x_bcdwh.shape
    x_m = x_bcdwh.reshape(b, c * d, w, h)          # free view, no transpose
    try:
        out = jax.block_until_ready(_mirror_call(x_m, flags, jnp.float16))
    except Exception:
        # TODO(synk): fp16 stores are not available from Mosaic on every TPU
        # generation; fall back to an f32 kernel output + wrapper-side cast.
        out = _mirror_call(x_m, flags, jnp.float32).astype(jnp.float16)
    return out.reshape(b, c, d, w, h)


if __name__ == "__main__":
    # Small shapes consistent with the module's 5-D (b, c, d, w, h) input.
    B, C, D, W, H = 4, 4, 8, 16, 16

    key = jax.random.PRNGKey(0)
    x = jax.random.normal(key, (B, C, D, W, H), dtype=jnp.float32)

    # TODO(synk): the original module draws x_flag / y_flag with host-side
    # np.random.uniform per batch; here the 0/1 decisions are fixed so that
    # all four (flip_h, flip_w) combinations are exercised deterministically.
    flags = jnp.array([[0, 0], [0, 1], [1, 0], [1, 1]], dtype=jnp.int32)

    out = mirror_tu(x, flags)
    out = jax.block_until_ready(out)

    # reference (mirrors the PyTorch loop semantics)
    xn = np.asarray(x)
    fn = np.asarray(flags)
    ref = np.zeros((B, C, D, W, H), np.float32)
    for _b in range(B):
        if fn[_b, 0] > 0:                       # x_flag > 0.5
            ref[_b] = xn[_b, :, :, :, ::-1]
        if fn[_b, 1] > 0:                       # y_flag > 0.5
            ref[_b] = ref[_b][:, :, ::-1, :]
    ref16 = ref.astype(np.float16)

    assert out.shape == (B, C, D, W, H) and out.dtype == jnp.float16
    assert np.allclose(np.asarray(out).astype(np.float32),
                       ref16.astype(np.float32), rtol=1e-3, atol=1e-3)

    print("KERNEL_OK")
</pallas_src>

<mosaic_0001>
module attributes {stable_mosaic.version = 11 : i64} {
  func.func @_mirror_kernel(%arg0: i32, %arg1: memref<4x2xi32, #tpu.memory_space<smem>>, %arg2: memref<1x32x16x16xf32, #tpu.memory_space<vmem>>, %arg3: memref<1x32x16x16xf16, #tpu.memory_space<vmem>>) attributes {dimension_semantics = [#tpu.dimension_semantics<parallel>], iteration_bounds = array<i64: 4>, scalar_prefetch = 1 : i64, scratch_operands = 0 : i64, tpu.core_type = #tpu.core_type<tc>, window_params = [{transform_indices = @transform_0, window_bounds = array<i64: 1, 32, 16, 16>}, {transform_indices = @transform_1, window_bounds = array<i64: 1, 32, 16, 16>}]} {
    %0 = arith.index_cast %arg0 : i32 to index
    %c0 = arith.constant 0 : index
    %1 = memref.load %arg1[%0, %c0] : memref<4x2xi32, #tpu.memory_space<smem>>
    %2 = arith.sitofp %1 : i32 to f32
    %3 = arith.index_cast %arg0 : i32 to index
    %c1 = arith.constant 1 : index
    %4 = memref.load %arg1[%3, %c1] : memref<4x2xi32, #tpu.memory_space<smem>>
    %5 = arith.sitofp %4 : i32 to f32
    %6 = tpu.iota {dimensions = array<i32: 0>} : vector<16x16xi32>
    %7 = tpu.iota {dimensions = array<i32: 1>} : vector<16x16xi32>
    %8 = arith.addi %6, %7 : vector<16x16xi32>
    %c15_i32 = arith.constant 15 : i32
    %9 = vector.broadcast %c15_i32 : i32 to vector<16x16xi32>
    %10 = arith.cmpi eq, %8, %9 : vector<16x16xi32>
    %cst = arith.constant 1.000000e+00 : f32
    %cst_0 = arith.constant 0.000000e+00 : f32
    %11 = vector.broadcast %cst : f32 to vector<16x16xf32>
    %12 = vector.broadcast %cst_0 : f32 to vector<16x16xf32>
    %13 = arith.select %10, %11, %12 : vector<16x16xi1>, vector<16x16xf32>
    %14 = vector.broadcast %2 : f32 to vector<16x16xf32>
    %15 = arith.mulf %13, %14 : vector<16x16xf32>
    %16 = tpu.iota {dimensions = array<i32: 0>} : vector<16x16xi32>
    %17 = tpu.iota {dimensions = array<i32: 1>} : vector<16x16xi32>
    %18 = arith.addi %16, %17 : vector<16x16xi32>
    %c15_i32_1 = arith.constant 15 : i32
    %19 = vector.broadcast %c15_i32_1 : i32 to vector<16x16xi32>
    %20 = arith.cmpi eq, %18, %19 : vector<16x16xi32>
    %cst_2 = arith.constant 1.000000e+00 : f32
    %cst_3 = arith.constant 0.000000e+00 : f32
    %21 = vector.broadcast %cst_2 : f32 to vector<16x16xf32>
    %22 = vector.broadcast %cst_3 : f32 to vector<16x16xf32>
    %23 = arith.select %20, %21, %22 : vector<16x16xi1>, vector<16x16xf32>
    %24 = arith.cmpi eq, %16, %17 : vector<16x16xi32>
    %cst_4 = arith.constant 1.000000e+00 : f32
    %cst_5 = arith.constant 0.000000e+00 : f32
    %25 = vector.broadcast %cst_4 : f32 to vector<16x16xf32>
    %26 = vector.broadcast %cst_5 : f32 to vector<16x16xf32>
    %27 = arith.select %24, %25, %26 : vector<16x16xi1>, vector<16x16xf32>
    %28 = vector.broadcast %5 : f32 to vector<16x16xf32>
    %29 = arith.mulf %23, %28 : vector<16x16xf32>
    %cst_6 = arith.constant 1.000000e+00 : f32
    %30 = arith.subf %cst_6, %5 : f32
    %31 = vector.broadcast %30 : f32 to vector<16x16xf32>
    %32 = arith.mulf %27, %31 : vector<16x16xf32>
    %33 = arith.addf %29, %32 : vector<16x16xf32>
    %c0_i32 = arith.constant 0 : i32
    %c32_i32 = arith.constant 32 : i32
    %34 = arith.addi %c0_i32, %c32_i32 : i32
    %c1_i32 = arith.constant 1 : i32
    scf.for %arg4 = %c0_i32 to %34 step %c1_i32  : i32 {
      %c0_8 = arith.constant 0 : index
      %35 = arith.index_cast %arg4 : i32 to index
      %c0_9 = arith.constant 0 : index
      %c0_10 = arith.constant 0 : index
      %36 = vector.load %arg2[%c0_8, %35, %c0_9, %c0_10] : memref<1x32x16x16xf32, #tpu.memory_space<vmem>>, vector<1x1x16x16xf32>
      %37 = vector.shape_cast %36 : vector<1x1x16x16xf32> to vector<16x16xf32>
      %cst_11 = arith.constant dense<0.000000e+00> : vector<16x16xf32>
      %38 = tpu.matmul %37, %15, %cst_11 {dimension_numbers = #tpu.dot_dimension_numbers<[1], [0], [0], [1], [0, 0, 1, 1], [], []>} : vector<16x16xf32>, vector<16x16xf32>, vector<16x16xf32> -> vector<16x16xf32>
      %cst_12 = arith.constant dense<0.000000e+00> : vector<16x16xf32>
      %39 = tpu.matmul %33, %38, %cst_12 {dimension_numbers = #tpu.dot_dimension_numbers<[1], [0], [0], [1], [0, 0, 1, 1], [], []>} : vector<16x16xf32>, vector<16x16xf32>, vector<16x16xf32> -> vector<16x16xf32>
      %40 = arith.truncf %39 : vector<16x16xf32> to vector<16x16xf16>
      %c0_13 = arith.constant 0 : index
      %41 = arith.index_cast %arg4 : i32 to index
      %c0_14 = arith.constant 0 : index
      %c0_15 = arith.constant 0 : index
      %42 = vector.load %arg3[%c0_13, %41, %c0_14, %c0_15] : memref<1x32x16x16xf16, #tpu.memory_space<vmem>>, vector<1x1x16x16xf16>
      %43 = vector.shape_cast %42 : vector<1x1x16x16xf16> to vector<16x16xf16>
      %44 = vector.shape_cast %40 : vector<16x16xf16> to vector<1x1x16x16xf16>
      tpu.vector_store %arg3[%c0_13, %41, %c0_14, %c0_15], %44 {strides = array<i32>} : memref<1x32x16x16xf16, #tpu.memory_space<vmem>>, vector<1x1x16x16xf16>,
    }
    %c32_i32_7 = arith.constant 32 : i32
    return
  }
  func.func @transform_0(%arg0: i32, %arg1: memref<4x2xi32, #tpu.memory_space<smem>>) -> (i32, i32, i32, i32) {
    %c0_i32 = arith.constant 0 : i32
    %c0_i32_0 = arith.constant 0 : i32
    %c0_i32_1 = arith.constant 0 : i32
    %c0_i32_2 = arith.constant 0 : i32
    return %arg0, %c0_i32, %c0_i32_0, %c0_i32_1 : i32, i32, i32, i32
  }
  func.func @transform_1(%arg0: i32, %arg1: memref<4x2xi32, #tpu.memory_space<smem>>) -> (i32, i32, i32, i32) {
    %c0_i32 = arith.constant 0 : i32
    %c0_i32_0 = arith.constant 0 : i32
    %c0_i32_1 = arith.constant 0 : i32
    %c0_i32_2 = arith.constant 0 : i32
    return %arg0, %c0_i32, %c0_i32_0, %c0_i32_1 : i32, i32, i32, i32
  }
}

module attributes {stable_mosaic.version = 11 : i64} {
  func.func @_mirror_kernel(%arg0: i32, %arg1: memref<4x2xi32, #tpu.memory_space<smem>>, %arg2: memref<1x32x16x16xf32, #tpu.memory_space<vmem>>, %arg3: memref<1x32x16x16xf32, #tpu.memory_space<vmem>>) attributes {dimension_semantics = [#tpu.dimension_semantics<parallel>], iteration_bounds = array<i64: 4>, scalar_prefetch = 1 : i64, scratch_operands = 0 : i64, tpu.core_type = #tpu.core_type<tc>, window_params = [{transform_indices = @transform_0, window_bounds = array<i64: 1, 32, 16, 16>}, {transform_indices = @transform_1, window_bounds = array<i64: 1, 32, 16, 16>}]} {
    %0 = arith.index_cast %arg0 : i32 to index
    %c0 = arith.constant 0 : index
    %1 = memref.load %arg1[%0, %c0] : memref<4x2xi32, #tpu.memory_space<smem>>
    %2 = arith.sitofp %1 : i32 to f32
    %3 = arith.index_cast %arg0 : i32 to index
    %c1 = arith.constant 1 : index
    %4 = memref.load %arg1[%3, %c1] : memref<4x2xi32, #tpu.memory_space<smem>>
    %5 = arith.sitofp %4 : i32 to f32
    %6 = tpu.iota {dimensions = array<i32: 0>} : vector<16x16xi32>
    %7 = tpu.iota {dimensions = array<i32: 1>} : vector<16x16xi32>
    %8 = arith.addi %6, %7 : vector<16x16xi32>
    %c15_i32 = arith.constant 15 : i32
    %9 = vector.broadcast %c15_i32 : i32 to vector<16x16xi32>
    %10 = arith.cmpi eq, %8, %9 : vector<16x16xi32>
    %cst = arith.constant 1.000000e+00 : f32
    %cst_0 = arith.constant 0.000000e+00 : f32
    %11 = vector.broadcast %cst : f32 to vector<16x16xf32>
    %12 = vector.broadcast %cst_0 : f32 to vector<16x16xf32>
    %13 = arith.select %10, %11, %12 : vector<16x16xi1>, vector<16x16xf32>
    %14 = vector.broadcast %2 : f32 to vector<16x16xf32>
    %15 = arith.mulf %13, %14 : vector<16x16xf32>
    %16 = tpu.iota {dimensions = array<i32: 0>} : vector<16x16xi32>
    %17 = tpu.iota {dimensions = array<i32: 1>} : vector<16x16xi32>
    %18 = arith.addi %16, %17 : vector<16x16xi32>
    %c15_i32_1 = arith.constant 15 : i32
    %19 = vector.broadcast %c15_i32_1 : i32 to vector<16x16xi32>
    %20 = arith.cmpi eq, %18, %19 : vector<16x16xi32>
    %cst_2 = arith.constant 1.000000e+00 : f32
    %cst_3 = arith.constant 0.000000e+00 : f32
    %21 = vector.broadcast %cst_2 : f32 to vector<16x16xf32>
    %22 = vector.broadcast %cst_3 : f32 to vector<16x16xf32>
    %23 = arith.select %20, %21, %22 : vector<16x16xi1>, vector<16x16xf32>
    %24 = arith.cmpi eq, %16, %17 : vector<16x16xi32>
    %cst_4 = arith.constant 1.000000e+00 : f32
    %cst_5 = arith.constant 0.000000e+00 : f32
    %25 = vector.broadcast %cst_4 : f32 to vector<16x16xf32>
    %26 = vector.broadcast %cst_5 : f32 to vector<16x16xf32>
    %27 = arith.select %24, %25, %26 : vector<16x16xi1>, vector<16x16xf32>
    %28 = vector.broadcast %5 : f32 to vector<16x16xf32>
    %29 = arith.mulf %23, %28 : vector<16x16xf32>
    %cst_6 = arith.constant 1.000000e+00 : f32
    %30 = arith.subf %cst_6, %5 : f32
    %31 = vector.broadcast %30 : f32 to vector<16x16xf32>
    %32 = arith.mulf %27, %31 : vector<16x16xf32>
    %33 = arith.addf %29, %32 : vector<16x16xf32>
    %c0_i32 = arith.constant 0 : i32
    %c32_i32 = arith.constant 32 : i32
    %34 = arith.addi %c0_i32, %c32_i32 : i32
    %c1_i32 = arith.constant 1 : i32
    scf.for %arg4 = %c0_i32 to %34 step %c1_i32  : i32 {
      %c0_8 = arith.constant 0 : index
      %35 = arith.index_cast %arg4 : i32 to index
      %c0_9 = arith.constant 0 : index
      %c0_10 = arith.constant 0 : index
      %36 = vector.load %arg2[%c0_8, %35, %c0_9, %c0_10] : memref<1x32x16x16xf32, #tpu.memory_space<vmem>>, vector<1x1x16x16xf32>
      %37 = vector.shape_cast %36 : vector<1x1x16x16xf32> to vector<16x16xf32>
      %cst_11 = arith.constant dense<0.000000e+00> : vector<16x16xf32>
      %38 = tpu.matmul %37, %15, %cst_11 {dimension_numbers = #tpu.dot_dimension_numbers<[1], [0], [0], [1], [0, 0, 1, 1], [], []>} : vector<16x16xf32>, vector<16x16xf32>, vector<16x16xf32> -> vector<16x16xf32>
      %cst_12 = arith.constant dense<0.000000e+00> : vector<16x16xf32>
      %39 = tpu.matmul %33, %38, %cst_12 {dimension_numbers = #tpu.dot_dimension_numbers<[1], [0], [0], [1], [0, 0, 1, 1], [], []>} : vector<16x16xf32>, vector<16x16xf32>, vector<16x16xf32> -> vector<16x16xf32>
      %c0_13 = arith.constant 0 : index
      %40 = arith.index_cast %arg4 : i32 to index
      %c0_14 = arith.constant 0 : index
      %c0_15 = arith.constant 0 : index
      %41 = vector.load %arg3[%c0_13, %40, %c0_14, %c0_15] : memref<1x32x16x16xf32, #tpu.memory_space<vmem>>, vector<1x1x16x16xf32>
      %42 = vector.shape_cast %41 : vector<1x1x16x16xf32> to vector<16x16xf32>
      %43 = vector.shape_cast %39 : vector<16x16xf32> to vector<1x1x16x16xf32>
      tpu.vector_store %arg3[%c0_13, %40, %c0_14, %c0_15], %43 {strides = array<i32>} : memref<1x32x16x16xf32, #tpu.memory_space<vmem>>, vector<1x1x16x16xf32>,
    }
    %c32_i32_7 = arith.constant 32 : i32
    return
  }
  func.func @transform_0(%arg0: i32, %arg1: memref<4x2xi32, #tpu.memory_space<smem>>) -> (i32, i32, i32, i32) {
    %c0_i32 = arith.constant 0 : i32
    %c0_i32_0 = arith.constant 0 : i32
    %c0_i32_1 = arith.constant 0 : i32
    %c0_i32_2 = arith.constant 0 : i32
    return %arg0, %c0_i32, %c0_i32_0, %c0_i32_1 : i32, i32, i32, i32
  }
  func.func @transform_1(%arg0: i32, %arg1: memref<4x2xi32, #tpu.memory_space<smem>>) -> (i32, i32, i32, i32) {
    %c0_i32 = arith.constant 0 : i32
    %c0_i32_0 = arith.constant 0 : i32
    %c0_i32_1 = arith.constant 0 : i32
    %c0_i32_2 = arith.constant 0 : i32
    return %arg0, %c0_i32, %c0_i32_0, %c0_i32_1 : i32, i32, i32, i32
  }
}

</mosaic_0001>

<llo_original>
// kernel: tpu_custom_call.1
$region0: #{tpu_custom_call.1}
  #allocation0 [shape = 'u32[]', space=smem, size = 0x4, offset = 0x4, fixed_abs, tag = 'smem constant byte address 0x4 - core index']
  #allocation1 [shape = 'u32[144,128]{1,0:T(1,128)}', space=vmem, size = 0x12000, scoped, tag = 'internal scratch']
  #allocation2 [shape = 's32[1]{0}', space=sflag, size = 0x4, scoped, tag = 'scoped memory for tpu_custom_call.1']
  #allocation3 [shape = 'u8[2048]{0}', space=smem, size = 0x800, scoped, tag = 'prefetched SMEM operand 0']
  %s0 = inlined_call_operand.vmem [shape: s32[4,2], index: 0, kind: input, shape index: {}]
  %s1 = inlined_call_operand.vmem [shape: f32[4,32,16,16], index: 1, kind: input, shape index: {}]
  %s2 = inlined_call_operand.vmem [shape: f32[4,32,16,16], index: 2, kind: output, shape index: {}]
  %s3 = sld [smem:[#allocation0]]
  $region44: #{tpu_custom_call.1} parent=0
    _
  %s5 = ssub.s32 1, %s3
  %s6 = scalar_select 0, %s5, %s3
  %s7 = sshll.u32 %s0, 4
  %s8 = int_to_ptr.vmem [resolvable:$true] %s7
  %10 = dma.vmem_to_smem %s8, 64, [#allocation3], [#allocation2]
  %11 = dma.done [#allocation2], 64
  %12 = sfence
  loop: start=0, step=1, limit=6
  $region2: #{tpu_custom_call.1} parent=0 // loop_pre_header
    _
  $region3: #{tpu_custom_call.1} parent=0 // loop_header
    %s14 = sphi 0, %s18
    %p15 = scmp.ge.s32.totalorder %s14, 6
    %s24 = sphi 0, %s26
    %s27 = sphi 0, %s24
    %s28 = sphi 0, %s27
    %s44 = sphi 0, %s28
    %s50 = sphi 0, %s52
    %s53 = sphi 0, %s50
    %s54 = sphi 0, %s53
    %s70 = sphi 0, %s54
  $region4: #{tpu_custom_call.1} parent=0 // loop_header_branch
    %17 = sbr.rel (%p15) target = $region8
  $region5: #{tpu_custom_call.1} parent=0 // loop_body
    %s19 = ssub.s32 %s14, 1
    %s20 = ssub.s32 %s14, 2
    %s21 = sadd.s32 %s14, 1
    %s22 = ssub.s32 %s14, %s21
    %p23 = scmp.eq.s32.totalorder %s22, 0
    %s25 = sadd.s32 %s24, 1
    %s26 = scalar_select %p23, %s24, %s25
    %p29 = pneg %p23
    %p30 = scmp.eq.s32.totalorder %s14, 3
    %p31 = por %p29, %p30
    %p32 = scmp.ne.s32.totalorder %s24, %s27
    %p33 = scmp.eq.s32.totalorder %s14, 0
    %p34 = por %p32, %p33
    %p35 = scmp.ne.s32.totalorder %s24, %s27
    %p36 = scmp.eq.s32.totalorder %s19, 3
    %p37 = por %p35, %p36
    %p38 = scmp.ne.s32.totalorder %s27, %s28
    %p39 = scmp.eq.s32.totalorder %s19, 0
    %p40 = por %p38, %p39
    %p41 = scmp.ne.s32.totalorder %s27, %s28
    %p42 = scmp.eq.s32.totalorder %s20, 3
    %p43 = por %p41, %p42
    %p45 = scmp.ne.s32.totalorder %s28, %s44
    %p46 = scmp.eq.s32.totalorder %s20, 0
    %p47 = por %p45, %p46
    %s48 = ssub.s32 %s14, %s21
    %p49 = scmp.eq.s32.totalorder %s48, 0
    %s51 = sadd.s32 %s50, 1
    %s52 = scalar_select %p49, %s50, %s51
    %p55 = pneg %p49
    %p56 = scmp.eq.s32.totalorder %s14, 3
    %p57 = por %p55, %p56
    %p58 = scmp.ne.s32.totalorder %s50, %s53
    %p59 = scmp.eq.s32.totalorder %s14, 0
    %p60 = por %p58, %p59
    %p61 = scmp.ne.s32.totalorder %s50, %s53
    %p62 = scmp.eq.s32.totalorder %s19, 3
    %p63 = por %p61, %p62
    %p64 = scmp.ne.s32.totalorder %s53, %s54
    %p65 = scmp.eq.s32.totalorder %s19, 0
    %p66 = por %p64, %p65
    %p67 = scmp.ne.s32.totalorder %s53, %s54
    %p68 = scmp.eq.s32.totalorder %s20, 3
    %p69 = por %p67, %p68
    %p71 = scmp.ne.s32.totalorder %s54, %s70
    %p72 = scmp.eq.s32.totalorder %s20, 0
    %p73 = por %p71, %p72
    %p74 = scmp.le.s32.totalorder 1, %s14
    %p75 = scmp.lt.s32.totalorder %s14, 5
    %p76 = pnand %p74, %p75
    %p77 = pneg %p76
    // Predicated region
    $region9: #{tpu_custom_call.1} parent=5 // pred_check
      _
    $region10: #{tpu_custom_call.1} parent=5 // pred_check_branch
      %79 = sbr.rel (%p76) target = $region12
    $region11: #{tpu_custom_call.1} parent=5 // pred_region
      %s80 = ssub.s32 %s14, 1
    $region12: #{tpu_custom_call.1} parent=5 // pred_fallthru
      _
    %p81 = scmp.lt.s32.totalorder %s14, 4
    // Predicated region
    $region13: #{tpu_custom_call.1} parent=5 // pred_check
      %p82 = pneg %p81
    $region14: #{tpu_custom_call.1} parent=5 // pred_check_branch
      %84 = sbr.rel (%p82) target = $region16
    $region15: #{tpu_custom_call.1} parent=5 // pred_region
      // Predicated region
      $region17: #{tpu_custom_call.1} parent=15 // pred_check
        %p85 = pneg %p34
      $region18: #{tpu_custom_call.1} parent=15 // pred_check_branch
        %87 = sbr.rel (%p85) target = $region20
      $region19: #{tpu_custom_call.1} parent=15 // pred_region
        %p88 = scmp.lt.s32.totalorder %s14, 3
        %s89 = scalar_select %p88, %s14, 3
        %s90 = smul.addr %s89, 64
        %s91 = smul.addr %s90, 8
        %s92 = scalar_lea.vmem %s1, %s91
      $region20: #{tpu_custom_call.1} parent=15 // pred_fallthru
        _
    $region16: #{tpu_custom_call.1} parent=5 // pred_fallthru
      _
    %p93 = scmp.le.s32.totalorder 1, %s14
    %p94 = scmp.lt.s32.totalorder %s14, 5
    %p95 = pnand %p93, %p94
    %p96 = pneg %p95
    // Predicated region
    $region21: #{tpu_custom_call.1} parent=5 // pred_check
      _
    $region22: #{tpu_custom_call.1} parent=5 // pred_check_branch
      %98 = sbr.rel (%p95) target = $region24
    $region23: #{tpu_custom_call.1} parent=5 // pred_region
      %s99 = ssub.s32 %s14, 1
      %p100 = scmp.lt.s32.totalorder %s19, 3
      %s101 = scalar_select %p100, %s19, 3
      %s102 = smul.addr %s101, 64
      %s103 = smul.addr %s102, 8
      %s104 = scalar_lea.vmem %s1, %s103
      %p105 = pneg %p40
      %p106 = pneg %p37
      %p107 = pneg %p66
      %p108 = pneg %p63
      %p109 = scmp.lt.s32.totalorder %s19, 3
      %s110 = scalar_select %p109, %s19, 3
      %s111 = smul.addr %s110, 64
      %s112 = smul.addr %s111, 8
      %s113 = scalar_lea.vmem %s2, %s112
      %p114 = scmp.lt.s32.totalorder %s19, 3
      %s115 = scalar_select %p114, %s19, 3
      %s116 = smul.addr %s115, 64
      %s117 = smul.addr %s116, 8
      %s118 = scalar_lea.vmem %s1, %s117
      %p119 = scmp.lt.s32.totalorder %s19, 3
      %s120 = scalar_select %p119, %s19, 3
      %s121 = smul.addr %s120, 64
      %s122 = smul.addr %s121, 8
      %s123 = scalar_lea.vmem %s2, %s122
      %s124 = smul.u32 %s19, 128
      %s125 = sld [smem:[#allocation3 + %s124]]
      %s126 = scvt.s32.f32 %s125
      %s127 = sadd.s32 %s124, 1
      %s128 = sld [smem:[#allocation3 + %s127]]
      %s129 = scvt.s32.f32 %s128
      %v130 = vlaneseq
      %v131 = vshrl.u32 %v130, 7
      %v132 = vadd.s32 %v131, 8
      %v133 = vlaneseq
      %v134 = vand.u32 %v133, 127
      %v135 = vadd.s32 %v131, %v134
      %v136 = vadd.s32 %v132, %v134
      %vm137 = vcmp.eq.s32.totalorder %v135, 15
      %vm138 = vcmp.eq.s32.totalorder %v136, 15
      %v139 = vsel %vm137, 1.0, 0.0
      %v140 = vsel %vm138, 1.0, 0.0
      %v141 = vstv %s126
      %v142 = vmul.f32 %v139, %v141
      %v143 = vmul.f32 %v140, %v141
      %vm144 = vcmp.eq.s32.totalorder %v131, %v134
      %vm145 = vcmp.eq.s32.totalorder %v132, %v134
      %v146 = vsel %vm144, 1.0, 0.0
      %v147 = vsel %vm145, 1.0, 0.0
      %v148 = vstv %s129
      %v149 = vmul.f32 %v139, %v148
      %v150 = vmul.f32 %v140, %v148
      %s151 = ssub.f32 1.0, %s129
      %v152 = vstv %s151
      %v153 = vmul.f32 %v146, %v152
      %v154 = vmul.f32 %v147, %v152
      %v155 = vadd.f32 %v149, %v153
      %v156 = vadd.f32 %v150, %v154
      loop: start=0, step=1, limit=32
      $region25: #{tpu_custom_call.1} parent=23 // loop_pre_header
        _
      $region26: #{tpu_custom_call.1} parent=23 // loop_header
        %s158 = sphi 0, %s162
        %p159 = scmp.ge.s32.totalorder %s158, 32
      $region27: #{tpu_custom_call.1} parent=23 // loop_header_branch
        %161 = sbr.rel (%p159) target = $region31
      $region28: #{tpu_custom_call.1} parent=23 // loop_body
        %s163 = smul.u32 %s158, 16
        %s164 = scalar_lea.vmem %s118, %s163
        %v165 = vld [vmem:[%s164] sm:$0xff]
        %v166 = vld [vmem:[%s164 + $0x8] sm:$0xff]
        %vm167 = vcmask 130048
        %v169 = vsel %vm167, %v165, 0
        %v172 = vsel %vm167, %v166, 0
        %174 = vmatprep.subr.mxu0 0.0
        %175 = vmatpush1.msra.mxu0 0.0
        %176 = vmatprep.subr.mxu0 0.0
        %177 = vmatpush1.msra.mxu0 0.0
        %178 = vmatprep.subr.mxu0 0.0
        %179 = vmatpush1.msra.mxu0 0.0
        %180 = vmatprep.subr.mxu0 0.0
        %181 = vmatpush1.msra.mxu0 0.0
        %182 = vmatprep.subr.mxu0 0.0
        %183 = vmatpush1.msra.mxu0 0.0
        %184 = vmatprep.subr.mxu0 0.0
        %185 = vmatpush1.msra.mxu0 0.0
        %186 = vmatprep.subr.mxu0 0.0
        %187 = vmatpush1.msra.mxu0 0.0
        %188 = vmatprep.subr.mxu0 0.0
        %189 = vmatpush1.msra.mxu0 0.0
        %190 = vmatprep.subr.mxu0 0.0
        %191 = vmatpush1.msra.mxu0 0.0
        %192 = vmatprep.subr.mxu0 0.0
        %193 = vmatpush1.msra.mxu0 0.0
        %194 = vmatprep.subr.mxu0 0.0
        %195 = vmatpush1.msra.mxu0 0.0
        %196 = vmatprep.subr.mxu0 0.0
        %197 = vmatpush1.msra.mxu0 0.0
        %198 = vmatprep.subr.mxu0 0.0
        %199 = vmatpush1.msra.mxu0 0.0
        %200 = vmatprep.subr.mxu0 0.0
        %201 = vmatpush1.msra.mxu0 0.0
        %202 = vmatprep.subr.mxu0 0.0
        %203 = vmatpush1.msra.mxu0 %v143
        %204 = vmatprep.subr.mxu0 0.0
        %205 = vmatpush1.msra.mxu0 %v142
        %206 = vmatprep.subr.mxu0 0.0
        %207 = vmatpush2.msra.mxu0 0.0
        %208 = vmatprep.subr.mxu0 0.0
        %209 = vmatpush2.msra.mxu0 0.0
        %210 = vmatprep.subr.mxu0 0.0
        %211 = vmatpush2.msra.mxu0 0.0
        %212 = vmatprep.subr.mxu0 0.0
        %213 = vmatpush2.msra.mxu0 0.0
        %214 = vmatprep.subr.mxu0 0.0
        %215 = vmatpush2.msra.mxu0 0.0
        %216 = vmatprep.subr.mxu0 0.0
        %217 = vmatpush2.msra.mxu0 0.0
        %218 = vmatprep.subr.mxu0 0.0
        %219 = vmatpush2.msra.mxu0 0.0
        %220 = vmatprep.subr.mxu0 0.0
        %221 = vmatpush2.msra.mxu0 0.0
        %222 = vmatprep.subr.mxu0 0.0
        %223 = vmatpush2.msra.mxu0 0.0
        %224 = vmatprep.subr.mxu0 0.0
        %225 = vmatpush2.msra.mxu0 0.0
        %226 = vmatprep.subr.mxu0 0.0
        %227 = vmatpush2.msra.mxu0 0.0
        %228 = vmatprep.subr.mxu0 0.0
        %229 = vmatpush2.msra.mxu0 0.0
        %230 = vmatprep.subr.mxu0 0.0
        %231 = vmatpush2.msra.mxu0 0.0
        %232 = vmatprep.subr.mxu0 0.0
        %233 = vmatpush2.msra.mxu0 0.0
        %234 = vmatprep.subr.mxu0 0.0
        %235 = vmatpush2.msra.mxu0 0.0
        %236 = vmatprep.subr.mxu0 0.0
        %237 = vmatpush2.msra.mxu0 0.0
        %238 = vmatprep.mubr.f32.mxu0 0.0
        %239 = vmatmul.mubr.f32.gmra.mxu0 %v169
        %v240 = vpop.f32.mrf.mxu0
        %v241 = vadd.f32 0.0, %v240
        %v242 = vpop.f32.mrf.mxu0
        %243 = vmatprep.mubr.f32.mxu0 0.0
        %244 = vmatmul.mubr.f32.gmra.mxu0 %v172
        %v245 = vpop.f32.mrf.mxu0
        %v246 = vadd.f32 0.0, %v245
        %v247 = vpop.f32.mrf.mxu0
        %248 = vdwg.mxu0
        %v250 = vsel %vm167, %v155, 0
        %v253 = vsel %vm167, %v156, 0
        %255 = vmatprep.subr.mxu0 0.0
        %256 = vmatpush1.msra.mxu0 0.0
        %257 = vmatprep.subr.mxu0 0.0
        %258 = vmatpush1.msra.mxu0 0.0
        %259 = vmatprep.subr.mxu0 0.0
        %260 = vmatpush1.msra.mxu0 0.0
        %261 = vmatprep.subr.mxu0 0.0
        %262 = vmatpush1.msra.mxu0 0.0
        %263 = vmatprep.subr.mxu0 0.0
        %264 = vmatpush1.msra.mxu0 0.0
        %265 = vmatprep.subr.mxu0 0.0
        %266 = vmatpush1.msra.mxu0 0.0
        %267 = vmatprep.subr.mxu0 0.0
        %268 = vmatpush1.msra.mxu0 0.0
        %269 = vmatprep.subr.mxu0 0.0
        %270 = vmatpush1.msra.mxu0 0.0
        %271 = vmatprep.subr.mxu0 0.0
        %272 = vmatpush1.msra.mxu0 0.0
        %273 = vmatprep.subr.mxu0 0.0
        %274 = vmatpush1.msra.mxu0 0.0
        %275 = vmatprep.subr.mxu0 0.0
        %276 = vmatpush1.msra.mxu0 0.0
        %277 = vmatprep.subr.mxu0 0.0
        %278 = vmatpush1.msra.mxu0 0.0
        %279 = vmatprep.subr.mxu0 0.0
        %280 = vmatpush1.msra.mxu0 0.0
        %281 = vmatprep.subr.mxu0 0.0
        %282 = vmatpush1.msra.mxu0 0.0
        %283 = vmatprep.subr.mxu0 0.0
        %284 = vmatpush1.msra.mxu0 %v246
        %285 = vmatprep.subr.mxu0 0.0
        %286 = vmatpush1.msra.mxu0 %v241
        %287 = vmatprep.subr.mxu0 0.0
        %288 = vmatpush2.msra.mxu0 0.0
        %289 = vmatprep.subr.mxu0 0.0
        %290 = vmatpush2.msra.mxu0 0.0
        %291 = vmatprep.subr.mxu0 0.0
        %292 = vmatpush2.msra.mxu0 0.0
        %293 = vmatprep.subr.mxu0 0.0
        %294 = vmatpush2.msra.mxu0 0.0
        %295 = vmatprep.subr.mxu0 0.0
        %296 = vmatpush2.msra.mxu0 0.0
        %297 = vmatprep.subr.mxu0 0.0
        %298 = vmatpush2.msra.mxu0 0.0
        %299 = vmatprep.subr.mxu0 0.0
        %300 = vmatpush2.msra.mxu0 0.0
        %301 = vmatprep.subr.mxu0 0.0
        %302 = vmatpush2.msra.mxu0 0.0
        %303 = vmatprep.subr.mxu0 0.0
        %304 = vmatpush2.msra.mxu0 0.0
        %305 = vmatprep.subr.mxu0 0.0
        %306 = vmatpush2.msra.mxu0 0.0
        %307 = vmatprep.subr.mxu0 0.0
        %308 = vmatpush2.msra.mxu0 0.0
        %309 = vmatprep.subr.mxu0 0.0
        %310 = vmatpush2.msra.mxu0 0.0
        %311 = vmatprep.subr.mxu0 0.0
        %312 = vmatpush2.msra.mxu0 0.0
        %313 = vmatprep.subr.mxu0 0.0
        %314 = vmatpush2.msra.mxu0 0.0
        %315 = vmatprep.subr.mxu0 0.0
        %316 = vmatpush2.msra.mxu0 0.0
        %317 = vmatprep.subr.mxu0 0.0
        %318 = vmatpush2.msra.mxu0 0.0
        %319 = vmatprep.mubr.f32.mxu0 0.0
        %320 = vmatmul.mubr.f32.gmra.mxu0 %v250
        %v321 = vpop.f32.mrf.mxu0
        %v322 = vadd.f32 0.0, %v321
        %v323 = vpop.f32.mrf.mxu0
        %324 = vmatprep.mubr.f32.mxu0 0.0
        %325 = vmatmul.mubr.f32.gmra.mxu0 %v253
        %v326 = vpop.f32.mrf.mxu0
        %v327 = vadd.f32 0.0, %v326
        %v328 = vpop.f32.mrf.mxu0
        %329 = vdwg.mxu0
        %s330 = scalar_lea.vmem %s123, %s163
        %331 = vst.msk [vmem:[%s330] sm:$0xff] %vm167, %v322
        %332 = vst.msk [vmem:[%s330 + $0x8] sm:$0xff] %vm167, %v327
      $region29: #{tpu_custom_call.1} parent=23 // loop_footer
        %s162 = sadd.s32 1, %s158
      $region30: #{tpu_custom_call.1} parent=23 // loop_footer_branch
        %157 = sbr.rel target = $region26
      $region31: #{tpu_custom_call.1} parent=23 // loop_exit
        _
      %p333 = scmp.lt.s32.totalorder %s19, 3
      %s334 = scalar_select %p333, %s19, 3
      %s335 = smul.addr %s334, 64
      %s336 = smul.addr %s335, 8
      %s337 = scalar_lea.vmem %s2, %s336
      // Predicated region
      $region32: #{tpu_custom_call.1} parent=23 // pred_check
        %p338 = pneg %p63
      $region33: #{tpu_custom_call.1} parent=23 // pred_check_branch
        %340 = sbr.rel (%p338) target = $region35
      $region34: #{tpu_custom_call.1} parent=23 // pred_region
        _
      $region35: #{tpu_custom_call.1} parent=23 // pred_fallthru
        _
    $region24: #{tpu_custom_call.1} parent=5 // pred_fallthru
      _
    %p341 = scmp.le.s32.totalorder 2, %s14
    // Predicated region
    $region36: #{tpu_custom_call.1} parent=5 // pred_check
      %p342 = pneg %p341
    $region37: #{tpu_custom_call.1} parent=5 // pred_check_branch
      %344 = sbr.rel (%p342) target = $region39
    $region38: #{tpu_custom_call.1} parent=5 // pred_region
      %s345 = ssub.s32 %s14, 2
      // Predicated region
      $region40: #{tpu_custom_call.1} parent=38 // pred_check
        %p346 = pneg %p69
      $region41: #{tpu_custom_call.1} parent=38 // pred_check_branch
        %348 = sbr.rel (%p346) target = $region43
      $region42: #{tpu_custom_call.1} parent=38 // pred_region
        %p349 = scmp.lt.s32.totalorder %s20, 3
        %s350 = scalar_select %p349, %s20, 3
        %s351 = smul.addr %s350, 64
        %s352 = smul.addr %s351, 8
        %s353 = scalar_lea.vmem %s2, %s352
      $region43: #{tpu_custom_call.1} parent=38 // pred_fallthru
        _
    $region39: #{tpu_custom_call.1} parent=5 // pred_fallthru
      _
  $region6: #{tpu_custom_call.1} parent=0 // loop_footer
    %s18 = sadd.s32 1, %s14
  $region7: #{tpu_custom_call.1} parent=0 // loop_footer_branch
    %13 = sbr.rel target = $region3
  $region8: #{tpu_custom_call.1} parent=0 // loop_exit
    _

</llo_original>
